<compile_context>
chip_gen: v7x
topology: tpu7x:2x2x1
jax: 0.10.0
libtpu: 0.0.40
codegen_flags: <defaults>
</compile_context>

<pallas_src>
import jax
import jax.numpy as jnp
from jax.experimental import pallas as pl
from jax.experimental.pallas import tpu as pltpu


def _mutinfo_kernel(x_ref, y_ref, xs_ref, ys_ref, out_ref,
                    m_x, m_y, m_xy, l_x, l_y, l_xy):
    j = pl.program_id(1)

    @pl.when(j == 0)
    def _init():
        m_x[...] = jnp.full(m_x.shape, -jnp.inf, dtype=m_x.dtype)
        m_y[...] = jnp.full(m_y.shape, -jnp.inf, dtype=m_y.dtype)
        m_xy[...] = jnp.full(m_xy.shape, -jnp.inf, dtype=m_xy.dtype)
        l_x[...] = jnp.zeros(l_x.shape, dtype=l_x.dtype)
        l_y[...] = jnp.zeros(l_y.shape, dtype=l_y.dtype)
        l_xy[...] = jnp.zeros(l_xy.shape, dtype=l_xy.dtype)

    # sx[b, s] = <x_b, xs_s>/var_s - 0.5*||xs_s||^2/var_s
    #   scale is folded into xs_ref, bias is folded into the last K-row of
    #   xs_ref (x_ref carries a matching ones column).  (tb,K)@(K,ts): both
    #   operands are lane-dense and in the MXU's native orientation.
    sx = jnp.dot(x_ref[...], xs_ref[...],
                 preferred_element_type=jnp.float32)              # (tb, ts)
    sy = jnp.dot(y_ref[...], ys_ref[...],
                 preferred_element_type=jnp.float32)              # (tb, ts)
    sxy = sx + sy                                                 # (tb, ts)

    # Online logsumexp (flash-attention style) across the S tiles.  The joint
    # term carries its own running max so it never underflows relative to the
    # marginal maxima (reference semantics).
    mx_new = jnp.maximum(m_x[...], jnp.max(sx, axis=-1, keepdims=True))
    my_new = jnp.maximum(m_y[...], jnp.max(sy, axis=-1, keepdims=True))
    mxy_new = jnp.maximum(m_xy[...], jnp.max(sxy, axis=-1, keepdims=True))

    l_x[...] = (jnp.exp(m_x[...] - mx_new) * l_x[...]
                + jnp.sum(jnp.exp(sx - mx_new), axis=-1, keepdims=True))
    l_y[...] = (jnp.exp(m_y[...] - my_new) * l_y[...]
                + jnp.sum(jnp.exp(sy - my_new), axis=-1, keepdims=True))
    l_xy[...] = (jnp.exp(m_xy[...] - mxy_new) * l_xy[...]
                 + jnp.sum(jnp.exp(sxy - mxy_new), axis=-1, keepdims=True))

    m_x[...] = mx_new
    m_y[...] = my_new
    m_xy[...] = mxy_new

    @pl.when(j == pl.num_programs(1) - 1)
    def _finalize():
        # E_log_pxy - E_log_px - E_log_py per row (row constants cancelled).
        out_ref[...] = (m_xy[...] + jnp.log(l_xy[...])
                        - m_x[...] - jnp.log(l_x[...])
                        - m_y[...] - jnp.log(l_y[...]))           # (tb, 1)


def _pick_tile(n, cap, align):
    """Largest t <= cap with n % t == 0 and t % align == 0 (whole axis if n <= cap)."""
    if n <= cap:
        return n
    t = (cap // align) * align
    while t >= align:
        if n % t == 0:
            return t
        t -= align
    return n


def mutinfo_estimator_forward(x, y, x_s, y_s, bandwidth, *, tb=None, ts=None):
    """Sphere var_mode forward pass of MutInfoEstimator. Returns a scalar."""
    # TODO(synk): 'diagonal' var_mode (per-sample per-dim variance) not implemented.
    B, x_dim = x.shape
    S, _ = x_s.shape
    y_dim = y_s.shape[1]
    assert y.shape[0] == B and y_s.shape[0] == S

    # Module-buffer prep (static buffers in the original nn.Module, done once
    # outside the hot loop):
    #   * 1/var folded into the stored samples,
    #   * samples transposed to (K, S) so per-step RHS tiles are lane-dense,
    #   * -0.5*||xs||^2/var bias stacked as an extra K-row, matched by a ones
    #     column on x/y, so the bias add rides the MXU matmul,
    #   * logA_x/logA_y cancel in the final LSE difference and are dropped.
    var_s = jnp.float32(bandwidth)
    gamma = jnp.float32(bandwidth)          # PyTorch module sets gamma = bandwidth
    x = x.astype(jnp.float32)
    y = y.astype(jnp.float32)
    x_s = x_s.astype(jnp.float32)
    y_s = y_s.astype(jnp.float32)

    xsT = (x_s / var_s).T                                            # (Dx, S)
    ysT = (y_s / gamma).T                                            # (Dy, S)
    bias_x = -0.5 * jnp.sum(x_s * x_s, axis=-1) / var_s              # (S,)
    bias_y = -0.5 * jnp.sum(y_s * y_s, axis=-1) / gamma              # (S,)
    xsT_aug = jnp.concatenate([xsT, bias_x[None, :]], axis=0)        # (Dx+1, S)
    ysT_aug = jnp.concatenate([ysT, bias_y[None, :]], axis=0)        # (Dy+1, S)
    ones_col = jnp.ones((B, 1), jnp.float32)
    x_aug = jnp.concatenate([x, ones_col], axis=1)                   # (B, Dx+1)
    y_aug = jnp.concatenate([y, ones_col], axis=1)                   # (B, Dy+1)
    kx = x_dim + 1
    ky = y_dim + 1

    # Tile choice: B outer/"parallel" (megacore), S innermost "arbitrary"
    # reduction.  ts cap 2048 amortizes the ~0.35us per-step overhead; tb is
    # split so the "parallel" axis yields >=2 blocks (v7x has 2 TensorCores;
    # the extra grid step is negligible on single-TC v5e/v6e).
    if tb is None:
        tb = _pick_tile(B, 256, 8)
        if B // tb < 2 and B >= 16 and B % 8 == 0:
            tb = _pick_tile(B, B // 2, 8)
    if ts is None:
        ts = _pick_tile(S, 2048, 128)
    assert B % tb == 0 and S % ts == 0, "ragged tiles not supported"
    # TODO(synk): a ragged last S tile would need -inf masking before the logsumexp.

    grid = (B // tb, S // ts)

    per_row = pl.pallas_call(
        _mutinfo_kernel,
        out_shape=jax.ShapeDtypeStruct((B, 1), jnp.float32),
        grid_spec=pltpu.PrefetchScalarGridSpec(
            num_scalar_prefetch=0,
            grid=grid,
            in_specs=[
                pl.BlockSpec((tb, kx), lambda i, j: (i, 0)),   # x (+ones col)
                pl.BlockSpec((tb, ky), lambda i, j: (i, 0)),   # y (+ones col)
                pl.BlockSpec((kx, ts), lambda i, j: (0, j)),   # xs^T/var (+bias row)
                pl.BlockSpec((ky, ts), lambda i, j: (0, j)),   # ys^T/gamma (+bias row)
            ],
            out_specs=pl.BlockSpec((tb, 1), lambda i, j: (i, 0)),
            # m_x, m_y, m_xy, l_x, l_y, l_xy running logsumexp state.
            scratch_shapes=[pltpu.VMEM((tb, 1), jnp.float32)] * 6,
        ),
        compiler_params=pltpu.CompilerParams(
            dimension_semantics=("parallel", "arbitrary"),
            # ~6 live (tb, ts) f32 temporaries + double-buffered inputs at the
            # (256, 2048) caps is ~14 MiB; 32 MiB gives headroom on every
            # generation (and lifts v5e's 16 MiB scoped default).
            vmem_limit_bytes=32 * 1024 * 1024,
        ),
    )(x_aug, y_aug, xsT_aug, ysT_aug)

    return jnp.mean(per_row)


def _reference_forward(x, y, x_s, y_s, bandwidth):
    # Plain-JAX transcription of the PyTorch forward (sphere mode).
    x_dim = x_s.shape[1]
    y_dim = y_s.shape[1]
    log2pi = jnp.log(2.0 * jnp.pi)
    var_s = jnp.float32(bandwidth)
    gamma = jnp.float32(bandwidth)
    logA_x = x_dim * (log2pi + jnp.log(var_s))
    logA_y = y_dim * (log2pi + jnp.log(gamma))
    dx = x[:, None, :] - x_s[None, :, :]
    dy = y[:, None, :] - y_s[None, :, :]
    sdx = (dx / var_s * dx).sum(-1)
    sdy = (dy / gamma * dy).sum(-1)
    lse = jax.scipy.special.logsumexp
    e_pxy = lse(-0.5 * (logA_x + logA_y + sdx + sdy), axis=-1)
    e_px = lse(-0.5 * (logA_x + sdx), axis=-1)
    e_py = lse(-0.5 * (logA_y + sdy), axis=-1)
    return (e_pxy - e_px - e_py).mean()


if __name__ == "__main__":
    key = jax.random.PRNGKey(0)
    k1, k2, k3, k4 = jax.random.split(key, 4)

    B = 16         # batch size
    S = 256        # num_s (stored samples)
    x_dim = 16
    y_dim = 8
    bandwidth = 0.5

    x_s = jax.random.normal(k1, (S, x_dim), dtype=jnp.float32)
    y_s = jax.random.normal(k2, (S, y_dim), dtype=jnp.float32)
    x = jax.random.normal(k3, (B, x_dim), dtype=jnp.float32)
    y = jax.random.normal(k4, (B, y_dim), dtype=jnp.float32)

    # Small tiles (tb=8, ts=128) so the demo exercises a 2x2 grid, the online
    # logsumexp carry across S tiles, and the per-B-tile scratch re-init.
    out = mutinfo_estimator_forward(x, y, x_s, y_s, bandwidth, tb=8, ts=128)
    out = jax.block_until_ready(out)

    ref = _reference_forward(x, y, x_s, y_s, bandwidth)
    if not jnp.allclose(out, ref, rtol=1e-4, atol=1e-4):
        raise AssertionError(f"mismatch: kernel={out} ref={ref}")

    # Also exercise the auto-tile path (tb split for >=2 parallel B blocks,
    # whole-S tile) to make sure the default configuration compiles and agrees.
    out_auto = jax.block_until_ready(
        mutinfo_estimator_forward(x, y, x_s, y_s, bandwidth))
    if not jnp.allclose(out_auto, ref, rtol=1e-4, atol=1e-4):
        raise AssertionError(f"mismatch (auto tiles): kernel={out_auto} ref={ref}")

    print("KERNEL_OK")
</pallas_src>

<mosaic_0001>
module attributes {stable_mosaic.version = 11 : i64} {
  func.func @_mutinfo_kernel(%arg0: i32, %arg1: i32, %arg2: memref<8x17xf32, #tpu.memory_space<vmem>>, %arg3: memref<8x9xf32, #tpu.memory_space<vmem>>, %arg4: memref<17x128xf32, #tpu.memory_space<vmem>>, %arg5: memref<9x128xf32, #tpu.memory_space<vmem>>, %arg6: memref<8x1xf32, #tpu.memory_space<vmem>>, %arg7: memref<8x1xf32, #tpu.memory_space<vmem>>, %arg8: memref<8x1xf32, #tpu.memory_space<vmem>>, %arg9: memref<8x1xf32, #tpu.memory_space<vmem>>, %arg10: memref<8x1xf32, #tpu.memory_space<vmem>>, %arg11: memref<8x1xf32, #tpu.memory_space<vmem>>, %arg12: memref<8x1xf32, #tpu.memory_space<vmem>>) attributes {dimension_semantics = [#tpu.dimension_semantics<parallel>, #tpu.dimension_semantics<arbitrary>], iteration_bounds = array<i64: 2, 2>, scalar_prefetch = 0 : i64, scratch_operands = 6 : i64, tpu.core_type = #tpu.core_type<tc>, window_params = [{transform_indices = @transform_0, window_bounds = array<i64: 8, 17>}, {transform_indices = @transform_1, window_bounds = array<i64: 8, 9>}, {transform_indices = @transform_2, window_bounds = array<i64: 17, 128>}, {transform_indices = @transform_3, window_bounds = array<i64: 9, 128>}, {transform_indices = @transform_4, window_bounds = array<i64: 8, 1>}]} {
    %c0_i32 = arith.constant 0 : i32
    %0 = arith.cmpi eq, %arg1, %c0_i32 : i32
    %1 = arith.extui %0 : i1 to i32
    %c0_i32_0 = arith.constant 0 : i32
    %2 = arith.cmpi ne, %1, %c0_i32_0 : i32
    scf.if %2 {
      %cst_46 = arith.constant 0xFF800000 : f32
      %64 = vector.broadcast %cst_46 : f32 to vector<8x1xf32>
      %c0_47 = arith.constant 0 : index
      %c0_48 = arith.constant 0 : index
      %65 = vector.load %arg7[%c0_47, %c0_48] : memref<8x1xf32, #tpu.memory_space<vmem>>, vector<8x1xf32>
      tpu.vector_store %arg7[%c0_47, %c0_48], %64 {strides = array<i32>} : memref<8x1xf32, #tpu.memory_space<vmem>>, vector<8x1xf32>,
      %cst_49 = arith.constant 0xFF800000 : f32
      %66 = vector.broadcast %cst_49 : f32 to vector<8x1xf32>
      %c0_50 = arith.constant 0 : index
      %c0_51 = arith.constant 0 : index
      %67 = vector.load %arg8[%c0_50, %c0_51] : memref<8x1xf32, #tpu.memory_space<vmem>>, vector<8x1xf32>
      tpu.vector_store %arg8[%c0_50, %c0_51], %66 {strides = array<i32>} : memref<8x1xf32, #tpu.memory_space<vmem>>, vector<8x1xf32>,
      %cst_52 = arith.constant 0xFF800000 : f32
      %68 = vector.broadcast %cst_52 : f32 to vector<8x1xf32>
      %c0_53 = arith.constant 0 : index
      %c0_54 = arith.constant 0 : index
      %69 = vector.load %arg9[%c0_53, %c0_54] : memref<8x1xf32, #tpu.memory_space<vmem>>, vector<8x1xf32>
      tpu.vector_store %arg9[%c0_53, %c0_54], %68 {strides = array<i32>} : memref<8x1xf32, #tpu.memory_space<vmem>>, vector<8x1xf32>,
      %cst_55 = arith.constant 0.000000e+00 : f32
      %70 = vector.broadcast %cst_55 : f32 to vector<8x1xf32>
      %c0_56 = arith.constant 0 : index
      %c0_57 = arith.constant 0 : index
      %71 = vector.load %arg10[%c0_56, %c0_57] : memref<8x1xf32, #tpu.memory_space<vmem>>, vector<8x1xf32>
      tpu.vector_store %arg10[%c0_56, %c0_57], %70 {strides = array<i32>} : memref<8x1xf32, #tpu.memory_space<vmem>>, vector<8x1xf32>,
      %cst_58 = arith.constant 0.000000e+00 : f32
      %72 = vector.broadcast %cst_58 : f32 to vector<8x1xf32>
      %c0_59 = arith.constant 0 : index
      %c0_60 = arith.constant 0 : index
      %73 = vector.load %arg11[%c0_59, %c0_60] : memref<8x1xf32, #tpu.memory_space<vmem>>, vector<8x1xf32>
      tpu.vector_store %arg11[%c0_59, %c0_60], %72 {strides = array<i32>} : memref<8x1xf32, #tpu.memory_space<vmem>>, vector<8x1xf32>,
      %cst_61 = arith.constant 0.000000e+00 : f32
      %74 = vector.broadcast %cst_61 : f32 to vector<8x1xf32>
      %c0_62 = arith.constant 0 : index
      %c0_63 = arith.constant 0 : index
      %75 = vector.load %arg12[%c0_62, %c0_63] : memref<8x1xf32, #tpu.memory_space<vmem>>, vector<8x1xf32>
      tpu.vector_store %arg12[%c0_62, %c0_63], %74 {strides = array<i32>} : memref<8x1xf32, #tpu.memory_space<vmem>>, vector<8x1xf32>,
    } else {
    }
    %c0 = arith.constant 0 : index
    %c0_1 = arith.constant 0 : index
    %3 = vector.load %arg2[%c0, %c0_1] : memref<8x17xf32, #tpu.memory_space<vmem>>, vector<8x17xf32>
    %c0_2 = arith.constant 0 : index
    %c0_3 = arith.constant 0 : index
    %4 = vector.load %arg4[%c0_2, %c0_3] : memref<17x128xf32, #tpu.memory_space<vmem>>, vector<17x128xf32>
    %cst = arith.constant dense<0.000000e+00> : vector<8x128xf32>
    %5 = tpu.matmul %3, %4, %cst {dimension_numbers = #tpu.dot_dimension_numbers<[1], [0], [0], [1], [0, 0, 1, 1], [], []>} : vector<8x17xf32>, vector<17x128xf32>, vector<8x128xf32> -> vector<8x128xf32>
    %c0_4 = arith.constant 0 : index
    %c0_5 = arith.constant 0 : index
    %6 = vector.load %arg3[%c0_4, %c0_5] : memref<8x9xf32, #tpu.memory_space<vmem>>, vector<8x9xf32>
    %c0_6 = arith.constant 0 : index
    %c0_7 = arith.constant 0 : index
    %7 = vector.load %arg5[%c0_6, %c0_7] : memref<9x128xf32, #tpu.memory_space<vmem>>, vector<9x128xf32>
    %cst_8 = arith.constant dense<0.000000e+00> : vector<8x128xf32>
    %8 = tpu.matmul %6, %7, %cst_8 {dimension_numbers = #tpu.dot_dimension_numbers<[1], [0], [0], [1], [0, 0, 1, 1], [], []>} : vector<8x9xf32>, vector<9x128xf32>, vector<8x128xf32> -> vector<8x128xf32>
    %9 = arith.addf %5, %8 : vector<8x128xf32>
    %c0_9 = arith.constant 0 : index
    %c0_10 = arith.constant 0 : index
    %10 = vector.load %arg7[%c0_9, %c0_10] : memref<8x1xf32, #tpu.memory_space<vmem>>, vector<8x1xf32>
    %cst_11 = arith.constant dense<0xFF800000> : vector<8xf32>
    %11 = vector.multi_reduction <maximumf>, %5, %cst_11 [1] : vector<8x128xf32> to vector<8xf32>
    %12 = vector.shape_cast %11 : vector<8xf32> to vector<8x1xf32>
    %13 = arith.maximumf %10, %12 : vector<8x1xf32>
    %c0_12 = arith.constant 0 : index
    %c0_13 = arith.constant 0 : index
    %14 = vector.load %arg8[%c0_12, %c0_13] : memref<8x1xf32, #tpu.memory_space<vmem>>, vector<8x1xf32>
    %cst_14 = arith.constant dense<0xFF800000> : vector<8xf32>
    %15 = vector.multi_reduction <maximumf>, %8, %cst_14 [1] : vector<8x128xf32> to vector<8xf32>
    %16 = vector.shape_cast %15 : vector<8xf32> to vector<8x1xf32>
    %17 = arith.maximumf %14, %16 : vector<8x1xf32>
    %c0_15 = arith.constant 0 : index
    %c0_16 = arith.constant 0 : index
    %18 = vector.load %arg9[%c0_15, %c0_16] : memref<8x1xf32, #tpu.memory_space<vmem>>, vector<8x1xf32>
    %cst_17 = arith.constant dense<0xFF800000> : vector<8xf32>
    %19 = vector.multi_reduction <maximumf>, %9, %cst_17 [1] : vector<8x128xf32> to vector<8xf32>
    %20 = vector.shape_cast %19 : vector<8xf32> to vector<8x1xf32>
    %21 = arith.maximumf %18, %20 : vector<8x1xf32>
    %c0_18 = arith.constant 0 : index
    %c0_19 = arith.constant 0 : index
    %22 = vector.load %arg7[%c0_18, %c0_19] : memref<8x1xf32, #tpu.memory_space<vmem>>, vector<8x1xf32>
    %23 = arith.subf %22, %13 : vector<8x1xf32>
    %24 = math.exp %23 : vector<8x1xf32>
    %c0_20 = arith.constant 0 : index
    %c0_21 = arith.constant 0 : index
    %25 = vector.load %arg10[%c0_20, %c0_21] : memref<8x1xf32, #tpu.memory_space<vmem>>, vector<8x1xf32>
    %26 = arith.mulf %24, %25 : vector<8x1xf32>
    %27 = vector.broadcast %13 : vector<8x1xf32> to vector<8x128xf32>
    %28 = arith.subf %5, %27 : vector<8x128xf32>
    %29 = math.exp %28 : vector<8x128xf32>
    %cst_22 = arith.constant dense<0.000000e+00> : vector<8xf32>
    %30 = vector.multi_reduction <add>, %29, %cst_22 [1] : vector<8x128xf32> to vector<8xf32>
    %31 = vector.shape_cast %30 : vector<8xf32> to vector<8x1xf32>
    %32 = arith.addf %26, %31 : vector<8x1xf32>
    %c0_23 = arith.constant 0 : index
    %c0_24 = arith.constant 0 : index
    %33 = vector.load %arg10[%c0_23, %c0_24] : memref<8x1xf32, #tpu.memory_space<vmem>>, vector<8x1xf32>
    tpu.vector_store %arg10[%c0_23, %c0_24], %32 {strides = array<i32>} : memref<8x1xf32, #tpu.memory_space<vmem>>, vector<8x1xf32>,
    %c0_25 = arith.constant 0 : index
    %c0_26 = arith.constant 0 : index
    %34 = vector.load %arg8[%c0_25, %c0_26] : memref<8x1xf32, #tpu.memory_space<vmem>>, vector<8x1xf32>
    %35 = arith.subf %34, %17 : vector<8x1xf32>
    %36 = math.exp %35 : vector<8x1xf32>
    %c0_27 = arith.constant 0 : index
    %c0_28 = arith.constant 0 : index
    %37 = vector.load %arg11[%c0_27, %c0_28] : memref<8x1xf32, #tpu.memory_space<vmem>>, vector<8x1xf32>
    %38 = arith.mulf %36, %37 : vector<8x1xf32>
    %39 = vector.broadcast %17 : vector<8x1xf32> to vector<8x128xf32>
    %40 = arith.subf %8, %39 : vector<8x128xf32>
    %41 = math.exp %40 : vector<8x128xf32>
    %cst_29 = arith.constant dense<0.000000e+00> : vector<8xf32>
    %42 = vector.multi_reduction <add>, %41, %cst_29 [1] : vector<8x128xf32> to vector<8xf32>
    %43 = vector.shape_cast %42 : vector<8xf32> to vector<8x1xf32>
    %44 = arith.addf %38, %43 : vector<8x1xf32>
    %c0_30 = arith.constant 0 : index
    %c0_31 = arith.constant 0 : index
    %45 = vector.load %arg11[%c0_30, %c0_31] : memref<8x1xf32, #tpu.memory_space<vmem>>, vector<8x1xf32>
    tpu.vector_store %arg11[%c0_30, %c0_31], %44 {strides = array<i32>} : memref<8x1xf32, #tpu.memory_space<vmem>>, vector<8x1xf32>,
    %c0_32 = arith.constant 0 : index
    %c0_33 = arith.constant 0 : index
    %46 = vector.load %arg9[%c0_32, %c0_33] : memref<8x1xf32, #tpu.memory_space<vmem>>, vector<8x1xf32>
    %47 = arith.subf %46, %21 : vector<8x1xf32>
    %48 = math.exp %47 : vector<8x1xf32>
    %c0_34 = arith.constant 0 : index
    %c0_35 = arith.constant 0 : index
    %49 = vector.load %arg12[%c0_34, %c0_35] : memref<8x1xf32, #tpu.memory_space<vmem>>, vector<8x1xf32>
    %50 = arith.mulf %48, %49 : vector<8x1xf32>
    %51 = vector.broadcast %21 : vector<8x1xf32> to vector<8x128xf32>
    %52 = arith.subf %9, %51 : vector<8x128xf32>
    %53 = math.exp %52 : vector<8x128xf32>
    %cst_36 = arith.constant dense<0.000000e+00> : vector<8xf32>
    %54 = vector.multi_reduction <add>, %53, %cst_36 [1] : vector<8x128xf32> to vector<8xf32>
    %55 = vector.shape_cast %54 : vector<8xf32> to vector<8x1xf32>
    %56 = arith.addf %50, %55 : vector<8x1xf32>
    %c0_37 = arith.constant 0 : index
    %c0_38 = arith.constant 0 : index
    %57 = vector.load %arg12[%c0_37, %c0_38] : memref<8x1xf32, #tpu.memory_space<vmem>>, vector<8x1xf32>
    tpu.vector_store %arg12[%c0_37, %c0_38], %56 {strides = array<i32>} : memref<8x1xf32, #tpu.memory_space<vmem>>, vector<8x1xf32>,
    %c0_39 = arith.constant 0 : index
    %c0_40 = arith.constant 0 : index
    %58 = vector.load %arg7[%c0_39, %c0_40] : memref<8x1xf32, #tpu.memory_space<vmem>>, vector<8x1xf32>
    tpu.vector_store %arg7[%c0_39, %c0_40], %13 {strides = array<i32>} : memref<8x1xf32, #tpu.memory_space<vmem>>, vector<8x1xf32>,
    %c0_41 = arith.constant 0 : index
    %c0_42 = arith.constant 0 : index
    %59 = vector.load %arg8[%c0_41, %c0_42] : memref<8x1xf32, #tpu.memory_space<vmem>>, vector<8x1xf32>
    tpu.vector_store %arg8[%c0_41, %c0_42], %17 {strides = array<i32>} : memref<8x1xf32, #tpu.memory_space<vmem>>, vector<8x1xf32>,
    %c0_43 = arith.constant 0 : index
    %c0_44 = arith.constant 0 : index
    %60 = vector.load %arg9[%c0_43, %c0_44] : memref<8x1xf32, #tpu.memory_space<vmem>>, vector<8x1xf32>
    tpu.vector_store %arg9[%c0_43, %c0_44], %21 {strides = array<i32>} : memref<8x1xf32, #tpu.memory_space<vmem>>, vector<8x1xf32>,
    %c1_i32 = arith.constant 1 : i32
    %61 = arith.cmpi eq, %arg1, %c1_i32 : i32
    %62 = arith.extui %61 : i1 to i32
    %c0_i32_45 = arith.constant 0 : i32
    %63 = arith.cmpi ne, %62, %c0_i32_45 : i32
    scf.if %63 {
      %c0_46 = arith.constant 0 : index
      %c0_47 = arith.constant 0 : index
      %64 = vector.load %arg9[%c0_46, %c0_47] : memref<8x1xf32, #tpu.memory_space<vmem>>, vector<8x1xf32>
      %c0_48 = arith.constant 0 : index
      %c0_49 = arith.constant 0 : index
      %65 = vector.load %arg12[%c0_48, %c0_49] : memref<8x1xf32, #tpu.memory_space<vmem>>, vector<8x1xf32>
      %66 = math.log %65 : vector<8x1xf32>
      %67 = arith.addf %64, %66 : vector<8x1xf32>
      %c0_50 = arith.constant 0 : index
      %c0_51 = arith.constant 0 : index
      %68 = vector.load %arg7[%c0_50, %c0_51] : memref<8x1xf32, #tpu.memory_space<vmem>>, vector<8x1xf32>
      %69 = arith.subf %67, %68 : vector<8x1xf32>
      %c0_52 = arith.constant 0 : index
      %c0_53 = arith.constant 0 : index
      %70 = vector.load %arg10[%c0_52, %c0_53] : memref<8x1xf32, #tpu.memory_space<vmem>>, vector<8x1xf32>
      %71 = math.log %70 : vector<8x1xf32>
      %72 = arith.subf %69, %71 : vector<8x1xf32>
      %c0_54 = arith.constant 0 : index
      %c0_55 = arith.constant 0 : index
      %73 = vector.load %arg8[%c0_54, %c0_55] : memref<8x1xf32, #tpu.memory_space<vmem>>, vector<8x1xf32>
      %74 = arith.subf %72, %73 : vector<8x1xf32>
      %c0_56 = arith.constant 0 : index
      %c0_57 = arith.constant 0 : index
      %75 = vector.load %arg11[%c0_56, %c0_57] : memref<8x1xf32, #tpu.memory_space<vmem>>, vector<8x1xf32>
      %76 = math.log %75 : vector<8x1xf32>
      %77 = arith.subf %74, %76 : vector<8x1xf32>
      %c0_58 = arith.constant 0 : index
      %c0_59 = arith.constant 0 : index
      %78 = vector.load %arg6[%c0_58, %c0_59] : memref<8x1xf32, #tpu.memory_space<vmem>>, vector<8x1xf32>
      tpu.vector_store %arg6[%c0_58, %c0_59], %77 {strides = array<i32>} : memref<8x1xf32, #tpu.memory_space<vmem>>, vector<8x1xf32>,
    } else {
    }
    return
  }
  func.func @transform_0(%arg0: i32, %arg1: i32) -> (i32, i32) {
    %c0_i32 = arith.constant 0 : i32
    %c0_i32_0 = arith.constant 0 : i32
    return %arg0, %c0_i32 : i32, i32
  }
  func.func @transform_1(%arg0: i32, %arg1: i32) -> (i32, i32) {
    %c0_i32 = arith.constant 0 : i32
    %c0_i32_0 = arith.constant 0 : i32
    return %arg0, %c0_i32 : i32, i32
  }
  func.func @transform_2(%arg0: i32, %arg1: i32) -> (i32, i32) {
    %c0_i32 = arith.constant 0 : i32
    %c0_i32_0 = arith.constant 0 : i32
    return %c0_i32, %arg1 : i32, i32
  }
  func.func @transform_3(%arg0: i32, %arg1: i32) -> (i32, i32) {
    %c0_i32 = arith.constant 0 : i32
    %c0_i32_0 = arith.constant 0 : i32
    return %c0_i32, %arg1 : i32, i32
  }
  func.func @transform_4(%arg0: i32, %arg1: i32) -> (i32, i32) {
    %c0_i32 = arith.constant 0 : i32
    %c0_i32_0 = arith.constant 0 : i32
    return %arg0, %c0_i32 : i32, i32
  }
}

</mosaic_0001>

<llo_original>
// kernel: tpu_custom_call.1
$region0: #{tpu_custom_call.1}
  #allocation0 [shape = 'u32[]', space=smem, size = 0x4, offset = 0x4, fixed_abs, tag = 'smem constant byte address 0x4 - core index']
  #allocation1 [shape = 'u32[144,128]{1,0:T(1,128)}', space=vmem, size = 0x12000, scoped, tag = 'internal scratch']
  #allocation2 [shape = 'f32[8,1]{1,0:T(8,128)}', space=vmem, size = 0x1000, scoped, tag = 'scratch operand']
  #allocation3 [shape = 'f32[8,1]{1,0:T(8,128)}', space=vmem, size = 0x1000, scoped, tag = 'scratch operand']
  #allocation4 [shape = 'f32[8,1]{1,0:T(8,128)}', space=vmem, size = 0x1000, scoped, tag = 'scratch operand']
  #allocation5 [shape = 'f32[8,1]{1,0:T(8,128)}', space=vmem, size = 0x1000, scoped, tag = 'scratch operand']
  #allocation6 [shape = 'f32[8,1]{1,0:T(8,128)}', space=vmem, size = 0x1000, scoped, tag = 'scratch operand']
  #allocation7 [shape = 'f32[8,1]{1,0:T(8,128)}', space=vmem, size = 0x1000, scoped, tag = 'scratch operand']
  %s0 = inlined_call_operand.hbm [shape: f32[16,17], index: 0, kind: input, shape index: {}]
  %s1 = inlined_call_operand.hbm [shape: f32[16,9], index: 1, kind: input, shape index: {}]
  %s2 = inlined_call_operand.hbm [shape: f32[17,256], index: 2, kind: input, shape index: {}]
  %s3 = inlined_call_operand.hbm [shape: f32[9,256], index: 3, kind: input, shape index: {}]
  %s4 = inlined_call_operand.vmem [shape: f32[16,1], index: 4, kind: output, shape index: {}]
  %s5 = sld [smem:[#allocation0]]
  $region73: #{tpu_custom_call.1} parent=0
    _
  %s7 = ssub.s32 1, %s5
  %s8 = scalar_select 0, %s7, %s5
  $region1: #{tpu_custom_call.1} parent=0
    #allocation8 [shape = 'u8[8192]{0}', space=vmem, size = 0x2000, scoped, tag = 'input window, operand 0']
    #allocation9 [shape = 's32[2]{0}', space=sflag, size = 0x8, scoped, tag = 'scoped memory for tpu_custom_call.1']
    #allocation10 [shape = 'u8[8192]{0}', space=vmem, size = 0x2000, scoped, tag = 'input window, operand 1']
    #allocation11 [shape = 's32[2]{0}', space=sflag, size = 0x8, scoped, tag = 'scoped memory for tpu_custom_call.1']
    #allocation12 [shape = 'u8[24576]{0}', space=vmem, size = 0x6000, scoped, tag = 'input window, operand 2']
    #allocation13 [shape = 'u8[16384]{0}', space=vmem, size = 0x4000, scoped, tag = 'input window, operand 3']
    #allocation14 [shape = 's32[2]{0}', space=sflag, size = 0x8, scoped, tag = 'scoped memory for tpu_custom_call.1']
    %9 = vsyncpa [#allocation9], 0
    %s10 = scalar_lea.sflag [#allocation9], 1
    %11 = vsyncpa %s10, 0
    %12 = vsyncpa [#allocation11], 0
    %s13 = scalar_lea.sflag [#allocation11], 1
    %14 = vsyncpa %s13, 0
    %15 = vsyncpa [#allocation14], 0
    %s16 = scalar_lea.sflag [#allocation14], 1
    %17 = vsyncpa %s16, 0
    loop: start=0, step=1, limit=6
    $region2: #{tpu_custom_call.1} parent=1 // loop_pre_header
      _
    $region3: #{tpu_custom_call.1} parent=1 // loop_header
      %s19 = sphi 0, %s23
      %p20 = scmp.ge.s32.totalorder %s19, 6
      %s26 = sphi 0, %s38
      %s27 = sphi 0, %s34
      %s28 = sphi 0, %s26
      %s29 = sphi 0, %s27
      %s30 = sphi 0, %s28
      %s31 = sphi 0, %s29
      %s41 = sphi 0, %s43
      %s44 = sphi 0, %s41
      %s45 = sphi 0, %s44
      %s61 = sphi 0, %s45
      %s67 = sphi 0, %s69
      %s70 = sphi 0, %s67
      %s71 = sphi 0, %s70
      %s87 = sphi 0, %s71
      %s93 = sphi 0, %s95
      %s96 = sphi 0, %s93
      %s97 = sphi 0, %s96
      %s113 = sphi 0, %s97
      %s119 = sphi 0, %s121
      %s122 = sphi 0, %s119
      %s123 = sphi 0, %s122
      %s139 = sphi 0, %s123
      %s145 = sphi 0, %s147
      %s148 = sphi 0, %s145
      %s149 = sphi 0, %s148
      %s165 = sphi 0, %s149
    $region4: #{tpu_custom_call.1} parent=1 // loop_header_branch
      %22 = sbr.rel (%p20) target = $region8
    $region5: #{tpu_custom_call.1} parent=1 // loop_body
      %s24 = ssub.s32 %s19, 1
      %s25 = ssub.s32 %s19, 2
      %s32 = sadd.s32 1, %s27
      %p33 = scmp.ge.s32.totalorder %s32, 2
      %s34 = scalar_select %p33, 0, %s32
      %s35 = sadd.s32 1, %s26
      %s36 = scalar_select %p33, %s35, %s26
      %p37 = scmp.ge.s32.totalorder %s36, 2
      %s38 = scalar_select %p37, 0, %s36
      %s39 = ssub.s32 %s26, %s38
      %p40 = scmp.eq.s32.totalorder %s39, 0
      %s42 = sadd.s32 %s41, 1
      %s43 = scalar_select %p40, %s41, %s42
      %p46 = pneg %p40
      %p47 = scmp.eq.s32.totalorder %s19, 3
      %p48 = por %p46, %p47
      %p49 = scmp.ne.s32.totalorder %s41, %s44
      %p50 = scmp.eq.s32.totalorder %s19, 0
      %p51 = por %p49, %p50
      %p52 = scmp.ne.s32.totalorder %s41, %s44
      %p53 = scmp.eq.s32.totalorder %s24, 3
      %p54 = por %p52, %p53
      %p55 = scmp.ne.s32.totalorder %s44, %s45
      %p56 = scmp.eq.s32.totalorder %s24, 0
      %p57 = por %p55, %p56
      %p58 = scmp.ne.s32.totalorder %s44, %s45
      %p59 = scmp.eq.s32.totalorder %s25, 3
      %p60 = por %p58, %p59
      %p62 = scmp.ne.s32.totalorder %s45, %s61
      %p63 = scmp.eq.s32.totalorder %s25, 0
      %p64 = por %p62, %p63
      %s65 = ssub.s32 %s26, %s38
      %p66 = scmp.eq.s32.totalorder %s65, 0
      %s68 = sadd.s32 %s67, 1
      %s69 = scalar_select %p66, %s67, %s68
      %p72 = pneg %p66
      %p73 = scmp.eq.s32.totalorder %s19, 3
      %p74 = por %p72, %p73
      %p75 = scmp.ne.s32.totalorder %s67, %s70
      %p76 = scmp.eq.s32.totalorder %s19, 0
      %p77 = por %p75, %p76
      %p78 = scmp.ne.s32.totalorder %s67, %s70
      %p79 = scmp.eq.s32.totalorder %s24, 3
      %p80 = por %p78, %p79
      %p81 = scmp.ne.s32.totalorder %s70, %s71
      %p82 = scmp.eq.s32.totalorder %s24, 0
      %p83 = por %p81, %p82
      %p84 = scmp.ne.s32.totalorder %s70, %s71
      %p85 = scmp.eq.s32.totalorder %s25, 3
      %p86 = por %p84, %p85
      %p88 = scmp.ne.s32.totalorder %s71, %s87
      %p89 = scmp.eq.s32.totalorder %s25, 0
      %p90 = por %p88, %p89
      %s91 = ssub.s32 %s27, %s34
      %p92 = scmp.eq.s32.totalorder %s91, 0
      %s94 = sadd.s32 %s93, 1
      %s95 = scalar_select %p92, %s93, %s94
      %p98 = pneg %p92
      %p99 = scmp.eq.s32.totalorder %s19, 3
      %p100 = por %p98, %p99
      %p101 = scmp.ne.s32.totalorder %s93, %s96
      %p102 = scmp.eq.s32.totalorder %s19, 0
      %p103 = por %p101, %p102
      %p104 = scmp.ne.s32.totalorder %s93, %s96
      %p105 = scmp.eq.s32.totalorder %s24, 3
      %p106 = por %p104, %p105
      %p107 = scmp.ne.s32.totalorder %s96, %s97
      %p108 = scmp.eq.s32.totalorder %s24, 0
      %p109 = por %p107, %p108
      %p110 = scmp.ne.s32.totalorder %s96, %s97
      %p111 = scmp.eq.s32.totalorder %s25, 3
      %p112 = por %p110, %p111
      %p114 = scmp.ne.s32.totalorder %s97, %s113
      %p115 = scmp.eq.s32.totalorder %s25, 0
      %p116 = por %p114, %p115
      %s117 = ssub.s32 %s27, %s34
      %p118 = scmp.eq.s32.totalorder %s117, 0
      %s120 = sadd.s32 %s119, 1
      %s121 = scalar_select %p118, %s119, %s120
      %p124 = pneg %p118
      %p125 = scmp.eq.s32.totalorder %s19, 3
      %p126 = por %p124, %p125
      %p127 = scmp.ne.s32.totalorder %s119, %s122
      %p128 = scmp.eq.s32.totalorder %s19, 0
      %p129 = por %p127, %p128
      %p130 = scmp.ne.s32.totalorder %s119, %s122
      %p131 = scmp.eq.s32.totalorder %s24, 3
      %p132 = por %p130, %p131
      %p133 = scmp.ne.s32.totalorder %s122, %s123
      %p134 = scmp.eq.s32.totalorder %s24, 0
      %p135 = por %p133, %p134
      %p136 = scmp.ne.s32.totalorder %s122, %s123
      %p137 = scmp.eq.s32.totalorder %s25, 3
      %p138 = por %p136, %p137
      %p140 = scmp.ne.s32.totalorder %s123, %s139
      %p141 = scmp.eq.s32.totalorder %s25, 0
      %p142 = por %p140, %p141
      %s143 = ssub.s32 %s26, %s38
      %p144 = scmp.eq.s32.totalorder %s143, 0
      %s146 = sadd.s32 %s145, 1
      %s147 = scalar_select %p144, %s145, %s146
      %p150 = pneg %p144
      %p151 = scmp.eq.s32.totalorder %s19, 3
      %p152 = por %p150, %p151
      %p153 = scmp.ne.s32.totalorder %s145, %s148
      %p154 = scmp.eq.s32.totalorder %s19, 0
      %p155 = por %p153, %p154
      %p156 = scmp.ne.s32.totalorder %s145, %s148
      %p157 = scmp.eq.s32.totalorder %s24, 3
      %p158 = por %p156, %p157
      %p159 = scmp.ne.s32.totalorder %s148, %s149
      %p160 = scmp.eq.s32.totalorder %s24, 0
      %p161 = por %p159, %p160
      %p162 = scmp.ne.s32.totalorder %s148, %s149
      %p163 = scmp.eq.s32.totalorder %s25, 3
      %p164 = por %p162, %p163
      %p166 = scmp.ne.s32.totalorder %s149, %s165
      %p167 = scmp.eq.s32.totalorder %s25, 0
      %p168 = por %p166, %p167
      %p169 = scmp.le.s32.totalorder 1, %s19
      %p170 = scmp.lt.s32.totalorder %s19, 5
      %p171 = pnand %p169, %p170
      %p172 = pneg %p171
      // Predicated region
      $region9: #{tpu_custom_call.1} parent=5 // pred_check
        _
      $region10: #{tpu_custom_call.1} parent=5 // pred_check_branch
        %174 = sbr.rel (%p171) target = $region12
      $region11: #{tpu_custom_call.1} parent=5 // pred_region
        %s175 = ssub.s32 %s19, 1
      $region12: #{tpu_custom_call.1} parent=5 // pred_fallthru
        _
      %p176 = scmp.lt.s32.totalorder %s19, 4
      // Predicated region
      $region13: #{tpu_custom_call.1} parent=5 // pred_check
        %p177 = pneg %p176
      $region14: #{tpu_custom_call.1} parent=5 // pred_check_branch
        %179 = sbr.rel (%p177) target = $region16
      $region15: #{tpu_custom_call.1} parent=5 // pred_region
        // Predicated region
        $region17: #{tpu_custom_call.1} parent=15 // pred_check
          %p180 = pneg %p51
        $region18: #{tpu_custom_call.1} parent=15 // pred_check_branch
          %182 = sbr.rel (%p180) target = $region20
        $region19: #{tpu_custom_call.1} parent=15 // pred_region
          %s183 = sand.u32 %s41, 1
          %s184 = scalar_lea.sflag [#allocation9], %s183
          %s185 = sand.u32 %s41, 1
          %s186 = smul.addr %s185, 8
          %s187 = scalar_lea.vmem [#allocation8], %s186
          %s189 = ssub.s32 128, 128
          %190 = vsyncadd %s184, %s189
          %s191 = smul.addr %s26, 128
          %s192 = scalar_lea.hbm %s0, %s191
          %s194 = sshll.u32 %s187, 4
          %s195 = int_to_ptr.vmem [resolvable:$true] %s194
          %197 = dma.hbm_to_vmem [thread:$0]  %s192, 128, %s195, %s184
        $region20: #{tpu_custom_call.1} parent=15 // pred_fallthru
          _
        // Predicated region
        $region21: #{tpu_custom_call.1} parent=15 // pred_check
          %p198 = pneg %p77
        $region22: #{tpu_custom_call.1} parent=15 // pred_check_branch
          %200 = sbr.rel (%p198) target = $region24
        $region23: #{tpu_custom_call.1} parent=15 // pred_region
          %s201 = sand.u32 %s19, 1
          %s202 = scalar_lea.sflag [#allocation11], %s201
          %s203 = sand.u32 %s67, 1
          %s204 = smul.addr %s203, 8
          %s205 = scalar_lea.vmem [#allocation10], %s204
          %s207 = ssub.s32 128, 128
          %208 = vsyncadd %s202, %s207
          %s209 = smul.addr %s26, 128
          %s210 = scalar_lea.hbm %s1, %s209
          %s212 = sshll.u32 %s205, 4
          %s213 = int_to_ptr.vmem [resolvable:$true] %s212
          %215 = dma.hbm_to_vmem [thread:$0]  %s210, 128, %s213, %s202
        $region24: #{tpu_custom_call.1} parent=15 // pred_fallthru
          _
        // Predicated region
        $region25: #{tpu_custom_call.1} parent=15 // pred_check
          %p216 = pneg %p103
        $region26: #{tpu_custom_call.1} parent=15 // pred_check_branch
          %218 = sbr.rel (%p216) target = $region28
        $region27: #{tpu_custom_call.1} parent=15 // pred_region
          %s219 = sand.u32 %s19, 1
          %s220 = scalar_lea.sflag [#allocation11], %s219
          %s221 = sand.u32 %s93, 1
          %s222 = smul.addr %s221, 24
          %s223 = scalar_lea.vmem [#allocation12], %s222
          %s225 = ssub.s32 384, 384
          %226 = vsyncadd %s220, %s225
          %s227 = smul.addr %s27, 128
          %s228 = scalar_lea.hbm %s2, %s227
          %s229 = sshll.u32 %s223, 4
          %s230 = int_to_ptr.vmem [resolvable:$true] %s229
          %235 = dma.hbm_to_vmem [thread:$0]  %s228, 384, %s230, %s220, 256, 128, 8
        $region28: #{tpu_custom_call.1} parent=15 // pred_fallthru
          _
        // Predicated region
        $region29: #{tpu_custom_call.1} parent=15 // pred_check
          %p236 = pneg %p129
        $region30: #{tpu_custom_call.1} parent=15 // pred_check_branch
          %238 = sbr.rel (%p236) target = $region32
        $region31: #{tpu_custom_call.1} parent=15 // pred_region
          %s239 = sand.u32 %s119, 1
          %s240 = scalar_lea.sflag [#allocation14], %s239
          %s241 = sand.u32 %s119, 1
          %s242 = smul.addr %s241, 16
          %s243 = scalar_lea.vmem [#allocation13], %s242
          %s245 = ssub.s32 256, 256
          %246 = vsyncadd %s240, %s245
          %s247 = smul.addr %s27, 128
          %s248 = scalar_lea.hbm %s3, %s247
          %s249 = sshll.u32 %s243, 4
          %s250 = int_to_ptr.vmem [resolvable:$true] %s249
          %255 = dma.hbm_to_vmem [thread:$0]  %s248, 256, %s250, %s240, 256, 128, 8
        $region32: #{tpu_custom_call.1} parent=15 // pred_fallthru
          _
      $region16: #{tpu_custom_call.1} parent=5 // pred_fallthru
        _
      %p256 = scmp.le.s32.totalorder 1, %s19
      %p257 = scmp.lt.s32.totalorder %s19, 5
      %p258 = pnand %p256, %p257
      %p259 = pneg %p258
      // Predicated region
      $region33: #{tpu_custom_call.1} parent=5 // pred_check
        _
      $region34: #{tpu_custom_call.1} parent=5 // pred_check_branch
        %261 = sbr.rel (%p258) target = $region36
      $region35: #{tpu_custom_call.1} parent=5 // pred_region
        %s262 = ssub.s32 %s19, 1
        %s263 = sand.u32 %s44, 1
        %s264 = scalar_lea.sflag [#allocation9], %s263
        %s265 = sand.u32 %s44, 1
        %s266 = smul.addr %s265, 8
        %s267 = scalar_lea.vmem [#allocation8], %s266
        // Predicated region
        $region37: #{tpu_custom_call.1} parent=35 // pred_check
          %p268 = pneg %p57
        $region38: #{tpu_custom_call.1} parent=35 // pred_check_branch
          %270 = sbr.rel (%p268) target = $region40
        $region39: #{tpu_custom_call.1} parent=35 // pred_region
          %271 = dma.done %s264, 128
        $region40: #{tpu_custom_call.1} parent=35 // pred_fallthru
          _
        %s272 = sand.u32 %s24, 1
        %s273 = scalar_lea.sflag [#allocation11], %s272
        %s274 = sand.u32 %s70, 1
        %s275 = smul.addr %s274, 8
        %s276 = scalar_lea.vmem [#allocation10], %s275
        // Predicated region
        $region41: #{tpu_custom_call.1} parent=35 // pred_check
          %p277 = pneg %p83
        $region42: #{tpu_custom_call.1} parent=35 // pred_check_branch
          %279 = sbr.rel (%p277) target = $region44
        $region43: #{tpu_custom_call.1} parent=35 // pred_region
          %280 = dma.done %s273, 128
        $region44: #{tpu_custom_call.1} parent=35 // pred_fallthru
          _
        %s281 = sand.u32 %s24, 1
        %s282 = scalar_lea.sflag [#allocation11], %s281
        %s283 = sand.u32 %s96, 1
        %s284 = smul.addr %s283, 24
        %s285 = scalar_lea.vmem [#allocation12], %s284
        // Predicated region
        $region45: #{tpu_custom_call.1} parent=35 // pred_check
          %p286 = pneg %p109
        $region46: #{tpu_custom_call.1} parent=35 // pred_check_branch
          %288 = sbr.rel (%p286) target = $region48
        $region47: #{tpu_custom_call.1} parent=35 // pred_region
          %289 = dma.done %s282, 384
        $region48: #{tpu_custom_call.1} parent=35 // pred_fallthru
          _
        %s290 = sand.u32 %s122, 1
        %s291 = scalar_lea.sflag [#allocation14], %s290
        %s292 = sand.u32 %s122, 1
        %s293 = smul.addr %s292, 16
        %s294 = scalar_lea.vmem [#allocation13], %s293
        // Predicated region
        $region49: #{tpu_custom_call.1} parent=35 // pred_check
          %p295 = pneg %p135
        $region50: #{tpu_custom_call.1} parent=35 // pred_check_branch
          %297 = sbr.rel (%p295) target = $region52
        $region51: #{tpu_custom_call.1} parent=35 // pred_region
          %298 = dma.done %s291, 256
        $region52: #{tpu_custom_call.1} parent=35 // pred_fallthru
          _
        %s299 = sand.u32 %s44, 1
        %s300 = scalar_lea.sflag [#allocation9], %s299
        %s301 = sand.u32 %s44, 1
        %s302 = smul.addr %s301, 8
        %s303 = scalar_lea.vmem [#allocation8], %s302
        %p304 = pneg %p57
        %p305 = pneg %p54
        %s306 = sand.u32 %s24, 1
        %s307 = scalar_lea.sflag [#allocation11], %s306
        %s308 = sand.u32 %s70, 1
        %s309 = smul.addr %s308, 8
        %s310 = scalar_lea.vmem [#allocation10], %s309
        %p311 = pneg %p83
        %p312 = pneg %p80
        %s313 = sand.u32 %s24, 1
        %s314 = scalar_lea.sflag [#allocation11], %s313
        %s315 = sand.u32 %s96, 1
        %s316 = smul.addr %s315, 24
        %s317 = scalar_lea.vmem [#allocation12], %s316
        %p318 = pneg %p109
        %p319 = pneg %p106
        %s320 = sand.u32 %s122, 1
        %s321 = scalar_lea.sflag [#allocation14], %s320
        %s322 = sand.u32 %s122, 1
        %s323 = smul.addr %s322, 16
        %s324 = scalar_lea.vmem [#allocation13], %s323
        %p325 = pneg %p135
        %p326 = pneg %p132
        %p327 = pneg %p161
        %p328 = pneg %p158
        %p329 = scmp.lt.s32.totalorder %s28, 1
        %s330 = scalar_select %p329, %s28, 1
        %s331 = smul.addr %s330, 8
        %s332 = scalar_lea.vmem %s4, %s331
        %p333 = scmp.lt.s32.totalorder %s28, 1
        %s334 = scalar_select %p333, %s28, 1
        %s335 = smul.addr %s334, 8
        %s336 = scalar_lea.vmem %s4, %s335
        %p337 = scmp.eq.s32.totalorder %s29, 0
        // Predicated region
        $region53: #{tpu_custom_call.1} parent=35 // pred_check
          %p338 = pneg %p337
        $region54: #{tpu_custom_call.1} parent=35 // pred_check_branch
          %340 = sbr.rel (%p338) target = $region56
        $region55: #{tpu_custom_call.1} parent=35 // pred_region
          %vm341 = vcmask 7168
          %342 = vst.msk [vmem:[#allocation2] sm:$0xff] %vm341, -inf
          %343 = vst.msk [vmem:[#allocation3] sm:$0xff] %vm341, -inf
          %344 = vst.msk [vmem:[#allocation4] sm:$0xff] %vm341, -inf
          %345 = vst.msk [vmem:[#allocation5] sm:$0xff] %vm341, 0.0
          %346 = vst.msk [vmem:[#allocation6] sm:$0xff] %vm341, 0.0
          %347 = vst.msk [vmem:[#allocation7] sm:$0xff] %vm341, 0.0
        $region56: #{tpu_custom_call.1} parent=35 // pred_fallthru
          _
        %v348 = vld [vmem:[%s267] sm:$0xff]
        %v349 = vld [vmem:[%s285] sm:$0xff]
        %v350 = vld [vmem:[%s285 + $0x8] sm:$0xff]
        %v351 = vld [vmem:[%s285 + $0x10] sm:$0x1]
        %vm352 = vcmask 138240
        %v354 = vsel %vm352, %v348, 0
        %vm356 = vcmask 1040384
        %v358 = vsel %vm356, %v351, 0
        %360 = vmatprep.subr.mxu0 0.0
        %361 = vmatpush1.msra.mxu0 %v349
        %362 = vmatprep.subr.mxu0 0.0
        %363 = vmatpush1.msra.mxu0 %v350
        %364 = vmatprep.subr.mxu0 0.0
        %365 = vmatpush1.msra.mxu0 %v358
        %366 = vmatprep.subr.mxu0 0.0
        %367 = vmatpush1.msra.mxu0 0.0
        %368 = vmatprep.subr.mxu0 0.0
        %369 = vmatpush1.msra.mxu0 0.0
        %370 = vmatprep.subr.mxu0 0.0
        %371 = vmatpush1.msra.mxu0 0.0
        %372 = vmatprep.subr.mxu0 0.0
        %373 = vmatpush1.msra.mxu0 0.0
        %374 = vmatprep.subr.mxu0 0.0
        %375 = vmatpush1.msra.mxu0 0.0
        %376 = vmatprep.subr.mxu0 0.0
        %377 = vmatpush1.msra.mxu0 0.0
        %378 = vmatprep.subr.mxu0 0.0
        %379 = vmatpush1.msra.mxu0 0.0
        %380 = vmatprep.subr.mxu0 0.0
        %381 = vmatpush1.msra.mxu0 0.0
        %382 = vmatprep.subr.mxu0 0.0
        %383 = vmatpush1.msra.mxu0 0.0
        %384 = vmatprep.subr.mxu0 0.0
        %385 = vmatpush1.msra.mxu0 0.0
        %386 = vmatprep.subr.mxu0 0.0
        %387 = vmatpush1.msra.mxu0 0.0
        %388 = vmatprep.subr.mxu0 0.0
        %389 = vmatpush1.msra.mxu0 0.0
        %390 = vmatprep.subr.mxu0 0.0
        %391 = vmatpush1.msra.mxu0 0.0
        %392 = vmatprep.subr.mxu0 0.0
        %393 = vmatpush1.msra.mxu0 0.0
        %394 = vmatprep.subr.mxu0 0.0
        %395 = vmatpush1.msra.mxu0 0.0
        %396 = vmatprep.subr.mxu0 0.0
        %397 = vmatpush1.msra.mxu0 0.0
        %398 = vmatprep.subr.mxu0 0.0
        %399 = vmatpush1.msra.mxu0 0.0
        %400 = vmatprep.subr.mxu0 0.0
        %401 = vmatpush1.msra.mxu0 0.0
        %402 = vmatprep.subr.mxu0 0.0
        %403 = vmatpush1.msra.mxu0 0.0
        %404 = vmatprep.subr.mxu0 0.0
        %405 = vmatpush1.msra.mxu0 0.0
        %406 = vmatprep.subr.mxu0 0.0
        %407 = vmatpush1.msra.mxu0 0.0
        %408 = vmatprep.subr.mxu0 0.0
        %409 = vmatpush1.msra.mxu0 0.0
        %410 = vmatprep.subr.mxu0 0.0
        %411 = vmatpush1.msra.mxu0 0.0
        %412 = vmatprep.subr.mxu0 0.0
        %413 = vmatpush1.msra.mxu0 0.0
        %414 = vmatprep.subr.mxu0 0.0
        %415 = vmatpush1.msra.mxu0 0.0
        %416 = vmatprep.subr.mxu0 0.0
        %417 = vmatpush1.msra.mxu0 0.0
        %418 = vmatprep.subr.mxu0 0.0
        %419 = vmatpush1.msra.mxu0 0.0
        %420 = vmatprep.subr.mxu0 0.0
        %421 = vmatpush1.msra.mxu0 0.0
        %422 = vmatprep.subr.mxu0 0.0
        %423 = vmatpush1.msra.mxu0 0.0
        %424 = vmatprep.mubr.f32.mxu0 0.0
        %425 = vmatmul.mubr.f32.gmra.mrb[0].mxu0 %v354
        %v426 = vpop.f32.mrb[0].mxu0
        %v427 = vadd.f32 0.0, %v426
        %v428 = vpop.f32.mrb[0].mxu0
        %429 = vdwg.mxu0
        %v430 = vld [vmem:[%s276] sm:$0xff]
        %v431 = vld [vmem:[%s294] sm:$0xff]
        %v432 = vld [vmem:[%s294 + $0x8] sm:$0x1]
        %vm433 = vcmask 72704
        %v435 = vsel %vm433, %v430, 0
        %v438 = vsel %vm356, %v432, 0
        %440 = vmatprep.subr.mxu0 0.0
        %441 = vmatpush1.msra.mxu0 %v431
        %442 = vmatprep.subr.mxu0 0.0
        %443 = vmatpush1.msra.mxu0 %v438
        %444 = vmatprep.subr.mxu0 0.0
        %445 = vmatpush1.msra.mxu0 0.0
        %446 = vmatprep.subr.mxu0 0.0
        %447 = vmatpush1.msra.mxu0 0.0
        %448 = vmatprep.subr.mxu0 0.0
        %449 = vmatpush1.msra.mxu0 0.0
        %450 = vmatprep.subr.mxu0 0.0
        %451 = vmatpush1.msra.mxu0 0.0
        %452 = vmatprep.subr.mxu0 0.0
        %453 = vmatpush1.msra.mxu0 0.0
        %454 = vmatprep.subr.mxu0 0.0
        %455 = vmatpush1.msra.mxu0 0.0
        %456 = vmatprep.subr.mxu0 0.0
        %457 = vmatpush1.msra.mxu0 0.0
        %458 = vmatprep.subr.mxu0 0.0
        %459 = vmatpush1.msra.mxu0 0.0
        %460 = vmatprep.subr.mxu0 0.0
        %461 = vmatpush1.msra.mxu0 0.0
        %462 = vmatprep.subr.mxu0 0.0
        %463 = vmatpush1.msra.mxu0 0.0
        %464 = vmatprep.subr.mxu0 0.0
        %465 = vmatpush1.msra.mxu0 0.0
        %466 = vmatprep.subr.mxu0 0.0
        %467 = vmatpush1.msra.mxu0 0.0
        %468 = vmatprep.subr.mxu0 0.0
        %469 = vmatpush1.msra.mxu0 0.0
        %470 = vmatprep.subr.mxu0 0.0
        %471 = vmatpush1.msra.mxu0 0.0
        %472 = vmatprep.subr.mxu0 0.0
        %473 = vmatpush1.msra.mxu0 0.0
        %474 = vmatprep.subr.mxu0 0.0
        %475 = vmatpush1.msra.mxu0 0.0
        %476 = vmatprep.subr.mxu0 0.0
        %477 = vmatpush1.msra.mxu0 0.0
        %478 = vmatprep.subr.mxu0 0.0
        %479 = vmatpush1.msra.mxu0 0.0
        %480 = vmatprep.subr.mxu0 0.0
        %481 = vmatpush1.msra.mxu0 0.0
        %482 = vmatprep.subr.mxu0 0.0
        %483 = vmatpush1.msra.mxu0 0.0
        %484 = vmatprep.subr.mxu0 0.0
        %485 = vmatpush1.msra.mxu0 0.0
        %486 = vmatprep.subr.mxu0 0.0
        %487 = vmatpush1.msra.mxu0 0.0
        %488 = vmatprep.subr.mxu0 0.0
        %489 = vmatpush1.msra.mxu0 0.0
        %490 = vmatprep.subr.mxu0 0.0
        %491 = vmatpush1.msra.mxu0 0.0
        %492 = vmatprep.subr.mxu0 0.0
        %493 = vmatpush1.msra.mxu0 0.0
        %494 = vmatprep.subr.mxu0 0.0
        %495 = vmatpush1.msra.mxu0 0.0
        %496 = vmatprep.subr.mxu0 0.0
        %497 = vmatpush1.msra.mxu0 0.0
        %498 = vmatprep.subr.mxu0 0.0
        %499 = vmatpush1.msra.mxu0 0.0
        %500 = vmatprep.subr.mxu0 0.0
        %501 = vmatpush1.msra.mxu0 0.0
        %502 = vmatprep.subr.mxu0 0.0
        %503 = vmatpush1.msra.mxu0 0.0
        %504 = vmatprep.mubr.f32.mxu0 0.0
        %505 = vmatmul.mubr.f32.gmra.mrb[0].mxu0 %v435
        %v506 = vpop.f32.mrb[0].mxu0
        %v507 = vadd.f32 0.0, %v506
        %v508 = vpop.f32.mrb[0].mxu0
        %509 = vdwg.mxu0
        %v510 = vadd.f32 %v427, %v507
        %v511 = vld [vmem:[#allocation2] sm:$0xff]
        %512 = vmax.xlane.f32.xlu0 %v427
        %v513 = vpop.xlane.xlu0 %512
        %v514 = vmax.f32 %v511, %v513
        %v515 = vld [vmem:[#allocation3] sm:$0xff]
        %516 = vmax.xlane.f32.xlu0 %v507
        %v517 = vpop.xlane.xlu0 %516
        %v518 = vmax.f32 %v515, %v517
        %v519 = vld [vmem:[#allocation4] sm:$0xff]
        %520 = vmax.xlane.f32.xlu0 %v510
        %v521 = vpop.xlane.xlu0 %520
        %v522 = vmax.f32 %v519, %v521
        %v523 = vsub.f32 %v511, %v514
        %v524 = vmul.f32 %v523, 1.442695
        %v525 = vpow.pop %v524
        %v526 = vld [vmem:[#allocation5] sm:$0xff]
        %v527 = vmul.f32 %v525, %v526
        %529 = vset.pattern.permute.xlu0 0
        %530 = vperm.xlu0 %529, %v514
        %v531 = vpop.permute.xlu0 %530
        %v533 = vsub.f32 %v427, %v531
        %v534 = vmul.f32 %v533, 1.442695
        %v535 = vpow.pop %v534
        %536 = vadd.xlane.f32.xlu0 %v535
        %v537 = vpop.xlane.xlu0 %536
        %v538 = vadd.f32 %v527, %v537
        %vm539 = vcmask 7168
        %540 = vst.msk [vmem:[#allocation5] sm:$0xff] %vm539, %v538
        %v541 = vld [vmem:[#allocation3] sm:$0xff]
        %v542 = vsub.f32 %v541, %v518
        %v543 = vmul.f32 %v542, 1.442695
        %v544 = vpow.pop %v543
        %v545 = vld [vmem:[#allocation6] sm:$0xff]
        %v546 = vmul.f32 %v544, %v545
        %548 = vset.pattern.permute.xlu0 0
        %549 = vperm.xlu0 %548, %v518
        %v550 = vpop.permute.xlu0 %549
        %v552 = vsub.f32 %v507, %v550
        %v553 = vmul.f32 %v552, 1.442695
        %v554 = vpow.pop %v553
        %555 = vadd.xlane.f32.xlu0 %v554
        %v556 = vpop.xlane.xlu0 %555
        %v557 = vadd.f32 %v546, %v556
        %558 = vst.msk [vmem:[#allocation6] sm:$0xff] %vm539, %v557
        %v559 = vld [vmem:[#allocation4] sm:$0xff]
        %v560 = vsub.f32 %v559, %v522
        %v561 = vmul.f32 %v560, 1.442695
        %v562 = vpow.pop %v561
        %v563 = vld [vmem:[#allocation7] sm:$0xff]
        %v564 = vmul.f32 %v562, %v563
        %566 = vset.pattern.permute.xlu0 0
        %567 = vperm.xlu0 %566, %v522
        %v568 = vpop.permute.xlu0 %567
        %v570 = vsub.f32 %v510, %v568
        %v571 = vmul.f32 %v570, 1.442695
        %v572 = vpow.pop %v571
        %573 = vadd.xlane.f32.xlu0 %v572
        %v574 = vpop.xlane.xlu0 %573
        %v575 = vadd.f32 %v564, %v574
        %576 = vst.msk [vmem:[#allocation7] sm:$0xff] %vm539, %v575
        %577 = vst.msk [vmem:[#allocation2] sm:$0xff] %vm539, %v514
        %578 = vst.msk [vmem:[#allocation3] sm:$0xff] %vm539, %v518
        %579 = vst.msk [vmem:[#allocation4] sm:$0xff] %vm539, %v522
        %p580 = scmp.eq.s32.totalorder %s29, 1
        // Predicated region
        $region57: #{tpu_custom_call.1} parent=35 // pred_check
          %p581 = pneg %p580
        $region58: #{tpu_custom_call.1} parent=35 // pred_check_branch
          %583 = sbr.rel (%p581) target = $region60
        $region59: #{tpu_custom_call.1} parent=35 // pred_region
          %v584 = vld [vmem:[#allocation4] sm:$0xff]
          %v585 = vld [vmem:[#allocation7] sm:$0xff]
          %v586 = vlog2.pop %v585
          %v587 = vmul.f32 %v586, 0.6931472
          %v588 = vadd.f32 %v584, %v587
          %v589 = vld [vmem:[#allocation2] sm:$0xff]
          %v590 = vsub.f32 %v588, %v589
          %v591 = vld [vmem:[#allocation5] sm:$0xff]
          %v592 = vlog2.pop %v591
          %v593 = vmul.f32 %v592, 0.6931472
          %v594 = vsub.f32 %v590, %v593
          %v595 = vld [vmem:[#allocation3] sm:$0xff]
          %v596 = vsub.f32 %v594, %v595
          %v597 = vld [vmem:[#allocation6] sm:$0xff]
          %v598 = vlog2.pop %v597
          %v599 = vmul.f32 %v598, 0.6931472
          %v600 = vsub.f32 %v596, %v599
          %601 = vst.msk [vmem:[%s336] sm:$0xff] %vm539, %v600
        $region60: #{tpu_custom_call.1} parent=35 // pred_fallthru
          _
        %p602 = scmp.lt.s32.totalorder %s28, 1
        %s603 = scalar_select %p602, %s28, 1
        %s604 = smul.addr %s603, 8
        %s605 = scalar_lea.vmem %s4, %s604
        // Predicated region
        $region61: #{tpu_custom_call.1} parent=35 // pred_check
          %p606 = pneg %p158
        $region62: #{tpu_custom_call.1} parent=35 // pred_check_branch
          %608 = sbr.rel (%p606) target = $region64
        $region63: #{tpu_custom_call.1} parent=35 // pred_region
          _
        $region64: #{tpu_custom_call.1} parent=35 // pred_fallthru
          _
      $region36: #{tpu_custom_call.1} parent=5 // pred_fallthru
        _
      %p609 = scmp.le.s32.totalorder 2, %s19
      // Predicated region
      $region65: #{tpu_custom_call.1} parent=5 // pred_check
        %p610 = pneg %p609
      $region66: #{tpu_custom_call.1} parent=5 // pred_check_branch
        %612 = sbr.rel (%p610) target = $region68
      $region67: #{tpu_custom_call.1} parent=5 // pred_region
        %s613 = ssub.s32 %s19, 2
        // Predicated region
        $region69: #{tpu_custom_call.1} parent=67 // pred_check
          %p614 = pneg %p164
        $region70: #{tpu_custom_call.1} parent=67 // pred_check_branch
          %616 = sbr.rel (%p614) target = $region72
        $region71: #{tpu_custom_call.1} parent=67 // pred_region
          %p617 = scmp.lt.s32.totalorder %s30, 1
          %s618 = scalar_select %p617, %s30, 1
          %s619 = smul.addr %s618, 8
          %s620 = scalar_lea.vmem %s4, %s619
        $region72: #{tpu_custom_call.1} parent=67 // pred_fallthru
          _
      $region68: #{tpu_custom_call.1} parent=5 // pred_fallthru
        _
    $region6: #{tpu_custom_call.1} parent=1 // loop_footer
      %s23 = sadd.s32 1, %s19
    $region7: #{tpu_custom_call.1} parent=1 // loop_footer_branch
      %18 = sbr.rel target = $region3
    $region8: #{tpu_custom_call.1} parent=1 // loop_exit
      _
    %621 = vsyncpa [#allocation9], 1
    %s622 = scalar_lea.sflag [#allocation9], 1
    %623 = vsyncpa %s622, 1
    %624 = vsyncpa [#allocation11], 1
    %s625 = scalar_lea.sflag [#allocation11], 1
    %626 = vsyncpa %s625, 1
    %627 = vsyncpa [#allocation14], 1
    %s628 = scalar_lea.sflag [#allocation14], 1
    %629 = vsyncpa %s628, 1

</llo_original>
